<compile_context>
chip_gen: v7x
topology: tpu7x:2x2x1
jax: 0.10.0
libtpu: 0.0.40
codegen_flags: <defaults>
</compile_context>

<pallas_src>
import functools
import math

import jax
import jax.numpy as jnp
from jax import lax
from jax.experimental import pallas as pl
from jax.experimental.pallas import tpu as pltpu


def _round_up(x, m):
    return ((x + m - 1) // m) * m


def _vmem_capacity_bytes():
    """Physical VMEM per TensorCore; conservative 64 MiB (v7x) fallback."""
    try:
        return int(pltpu.get_tpu_info().vmem_capacity_bytes)
    except Exception:
        return 64 * 1024 * 1024


def _erf_poly(x):
    # Abramowitz & Stegun 7.1.26, max abs error ~1.5e-7.  Uses only abs/where/
    # mul/add and exp (EUP), so it always lowers on the Mosaic backend.
    p = 0.3275911
    a1, a2, a3, a4, a5 = (0.254829592, -0.284496736, 1.421413741,
                          -1.453152027, 1.061405429)
    ax = jnp.abs(x)
    t = 1.0 / (1.0 + p * ax)
    poly = ((((a5 * t + a4) * t + a3) * t + a2) * t + a1) * t
    erf_abs = 1.0 - poly * jnp.exp(-ax * ax)
    return jnp.where(x < 0, -erf_abs, erf_abs)


def _gelu_exact(x):
    # nn.GELU() default: 0.5 * x * (1 + erf(x / sqrt(2)))
    return 0.5 * x * (1.0 + _erf_poly(x * (1.0 / math.sqrt(2.0))))


def _gelu_tanh(x):
    c = math.sqrt(2.0 / math.pi)
    return 0.5 * x * (1.0 + jnp.tanh(c * (x + 0.044715 * (x * x * x))))


# ---------------------------------------------------------------------------
# Kernels
# ---------------------------------------------------------------------------

def _mlp_kernel_resident(x_ref, w1_ref, w2_ref, o_ref, *, gelu_fn):
    # grid = (M_p // tm,); weights resident in VMEM (constant index_map).
    h = jnp.dot(x_ref[...], w1_ref[...], preferred_element_type=jnp.float32)
    h = gelu_fn(h)
    o_ref[...] = jnp.dot(h.astype(w2_ref.dtype), w2_ref[...],
                         preferred_element_type=jnp.float32).astype(o_ref.dtype)


def _mlp_kernel_reduce(x_ref, w1_ref, w2_ref, o_ref, acc_ref, *, gelu_fn):
    # grid = (M_p // tm, H_p // th); axis 1 streams the hidden dimension.
    k = pl.program_id(1)

    @pl.when(k == 0)
    def _():
        acc_ref[...] = jnp.zeros_like(acc_ref)

    h = jnp.dot(x_ref[...], w1_ref[...], preferred_element_type=jnp.float32)
    h = gelu_fn(h)
    acc_ref[...] += jnp.dot(h.astype(w2_ref.dtype), w2_ref[...],
                            preferred_element_type=jnp.float32)

    @pl.when(k == pl.num_programs(1) - 1)
    def _():
        o_ref[...] = acc_ref[...].astype(o_ref.dtype)


# ---------------------------------------------------------------------------
# Wrappers
# ---------------------------------------------------------------------------

def prepare_mlp_weights(w1_t, w2_t, *, compute_dtype=jnp.bfloat16):
    """Pad + cast the weights once (hoisted out of the per-call path).

    w1_t : [d_in, d_hidden]  (= linear_1.weight.T)
    w2_t : [d_hidden, d_out] (= linear_2.weight.T)
    Returns (w1p [d_in, H_p], w2p [H_p, d_out_p], d_out).
    """
    d_in, d_hidden = w1_t.shape
    d_hidden2, d_out = w2_t.shape
    assert d_hidden == d_hidden2, "w1_t/w2_t hidden dims mismatch"
    # Hidden padded to 256 (full-width 256x256 MXU on v6e/v7x) once it exceeds
    # a single lane tile; tiny hidden stays at 128.  d_out padded to 128 for
    # lane-dense output stores.  GELU(0)=0 and the padded columns/rows are
    # all-zero, so padding is numerically exact.
    h_mult = 256 if d_hidden > 128 else 128
    d_h_p = _round_up(d_hidden, h_mult)
    d_out_p = _round_up(d_out, 128)
    w1p = jnp.zeros((d_in, d_h_p), compute_dtype)
    w1p = w1p.at[:, :d_hidden].set(w1_t.astype(compute_dtype))
    w2p = jnp.zeros((d_h_p, d_out_p), compute_dtype)
    w2p = w2p.at[:d_hidden, :d_out].set(w2_t.astype(compute_dtype))
    return w1p, w2p, d_out


def mlp_pallas_prepared(x, w1p, w2p, d_out, *, tm=None, approximate_gelu=False):
    """out = gelu(x @ w1p) @ w2p, sliced back to d_out columns."""
    orig_shape = x.shape
    out_dtype = x.dtype
    d_in, d_h_p = w1p.shape
    d_h_p2, d_out_p = w2p.shape
    assert d_h_p == d_h_p2, "w1p/w2p hidden dims mismatch"
    assert orig_shape[-1] == d_in, "x feature dim must match w1p"
    compute_dtype = w1p.dtype

    x2 = x.reshape(-1, d_in).astype(compute_dtype)
    M = x2.shape[0]

    in_b = jnp.dtype(compute_dtype).itemsize
    out_b = jnp.dtype(out_dtype).itemsize
    budget = int(0.8 * _vmem_capacity_bytes())   # never over-commit v7x 64 MiB
    gelu_fn = _gelu_tanh if approximate_gelu else _gelu_exact

    def pick_tm(default):
        if tm is not None:
            t = tm
        else:
            t = min(default, _round_up(M, 16))
            # Keep >=2 row tiles when M allows so both v7x TensorCores work.
            if M >= 32 and -(-M // t) < 2:
                t = _round_up(-(-M // 2), 16)
        return max(16, _round_up(t, 16))

    cost = pl.CostEstimate(
        flops=2 * M * d_in * d_h_p + 2 * M * d_h_p * d_out_p,
        transcendentals=M * d_h_p,
        bytes_accessed=(M * d_in * in_b + d_in * d_h_p * in_b
                        + d_h_p * d_out_p * in_b + M * d_out_p * out_b),
    )

    # ---- Path A: weights resident in VMEM, single parallel row-tile axis ---
    def ws_resident(t):
        return (2 * t * d_in * in_b              # x tile (double-buffered)
                + 2 * d_in * d_h_p * in_b        # w1 (worst-case 2 buffers)
                + 2 * d_h_p * d_out_p * in_b     # w2 (worst-case 2 buffers)
                + 2 * t * d_out_p * out_b        # out tile (double-buffered)
                + t * d_h_p * (4 + in_b))        # gelu intermediate f32 + bf16

    tm_a = pick_tm(256)
    if ws_resident(tm_a) <= budget:
        M_p = _round_up(M, tm_a)
        xp = x2 if M_p == M else (
            jnp.zeros((M_p, d_in), compute_dtype).at[:M].set(x2))
        vmem_limit = int(min(max(2 * ws_resident(tm_a), 32 * 1024 * 1024),
                             budget))
        out_p = pl.pallas_call(
            functools.partial(_mlp_kernel_resident, gelu_fn=gelu_fn),
            out_shape=jax.ShapeDtypeStruct((M_p, d_out_p), out_dtype),
            grid_spec=pltpu.PrefetchScalarGridSpec(
                num_scalar_prefetch=0,
                grid=(M_p // tm_a,),
                in_specs=[
                    pl.BlockSpec((tm_a, d_in), lambda i: (i, 0)),
                    pl.BlockSpec((d_in, d_h_p), lambda i: (0, 0)),     # resident
                    pl.BlockSpec((d_h_p, d_out_p), lambda i: (0, 0)),  # resident
                ],
                out_specs=pl.BlockSpec((tm_a, d_out_p), lambda i: (i, 0)),
            ),
            compiler_params=pltpu.CompilerParams(
                dimension_semantics=("parallel",),
                vmem_limit_bytes=vmem_limit,
            ),
            cost_estimate=cost,
        )(xp, w1p, w2p)
    else:
        # ---- Path B: stream hidden dim as an inner "arbitrary" reduction ---
        # TODO(synk): additionally tile d_out for extremely large d_out_p (to
        # bound the f32 accumulator); not needed for vision-sampler shapes.
        th = 512 if d_h_p % 512 == 0 else (256 if d_h_p % 256 == 0 else 128)
        tm_b = pick_tm(512)   # bigger row tile keeps streamed weights MXU-bound

        def ws_reduce(t):
            return (2 * t * d_in * in_b + 2 * d_in * th * in_b
                    + 2 * th * d_out_p * in_b + 2 * t * d_out_p * out_b
                    + t * d_out_p * 4            # f32 accumulator scratch
                    + t * th * (4 + in_b))       # gelu intermediate

        while tm_b > 16 and ws_reduce(tm_b) > budget:
            tm_b = max(16, _round_up(tm_b // 2, 16))
        M_p = _round_up(M, tm_b)
        xp = x2 if M_p == M else (
            jnp.zeros((M_p, d_in), compute_dtype).at[:M].set(x2))
        vmem_limit = int(min(max(2 * ws_reduce(tm_b), 32 * 1024 * 1024),
                             budget))
        out_p = pl.pallas_call(
            functools.partial(_mlp_kernel_reduce, gelu_fn=gelu_fn),
            out_shape=jax.ShapeDtypeStruct((M_p, d_out_p), out_dtype),
            grid_spec=pltpu.PrefetchScalarGridSpec(
                num_scalar_prefetch=0,
                grid=(M_p // tm_b, d_h_p // th),
                in_specs=[
                    pl.BlockSpec((tm_b, d_in), lambda i, k: (i, 0)),
                    pl.BlockSpec((d_in, th), lambda i, k: (0, k)),
                    pl.BlockSpec((th, d_out_p), lambda i, k: (k, 0)),
                ],
                out_specs=pl.BlockSpec((tm_b, d_out_p), lambda i, k: (i, 0)),
                scratch_shapes=[pltpu.VMEM((tm_b, d_out_p), jnp.float32)],
            ),
            compiler_params=pltpu.CompilerParams(
                dimension_semantics=("parallel", "arbitrary"),
                vmem_limit_bytes=vmem_limit,
            ),
            cost_estimate=cost,
        )(xp, w1p, w2p)

    out = out_p[:M, :d_out]
    return out.reshape(*orig_shape[:-1], d_out)


def mlp_pallas(x, w1_t, w2_t, *, compute_dtype=jnp.bfloat16, tm=None,
               approximate_gelu=False):
    """Convenience one-shot wrapper (pad/cast + kernel).  For repeated calls,
    hoist prepare_mlp_weights() out of the hot path."""
    w1p, w2p, d_out = prepare_mlp_weights(w1_t, w2_t,
                                          compute_dtype=compute_dtype)
    return mlp_pallas_prepared(x, w1p, w2p, d_out, tm=tm,
                               approximate_gelu=approximate_gelu)


def _init_linear_weight(key, out_features, in_features, dtype=jnp.float32):
    # Deterministic synthetic init matching nn.Linear's kaiming-uniform bound.
    bound = 1.0 / math.sqrt(in_features)
    return jax.random.uniform(key, (out_features, in_features),
                              minval=-bound, maxval=bound, dtype=dtype)


if __name__ == "__main__":
    # Small shapes consistent with the module's forward: x [B, S, d_in].
    B, S, d_in, d_hidden, d_out = 2, 8, 32, 64, 32

    key = jax.random.PRNGKey(0)
    kx, k1, k2 = jax.random.split(key, 3)

    x = jax.random.normal(kx, (B, S, d_in), dtype=jnp.float32)
    # PyTorch linear weights are [out, in]; the kernel uses their transpose.
    w1 = _init_linear_weight(k1, d_hidden, d_in)   # linear_1.weight
    w2 = _init_linear_weight(k2, d_out, d_hidden)  # linear_2.weight

    # Weight prep hoisted out of the per-call path (done once at init).
    w1p, w2p, d_out_real = prepare_mlp_weights(w1.T, w2.T)

    y = mlp_pallas_prepared(x, w1p, w2p, d_out_real)
    jax.block_until_ready(y)

    # Reference in plain f32 JAX with exact (erf) GELU, i.e. nn.GELU() default.
    h_ref = x @ w1.T
    h_ref = 0.5 * h_ref * (1.0 + lax.erf(h_ref / math.sqrt(2.0)))
    y_ref = h_ref @ w2.T

    assert y.shape == (B, S, d_out)
    # bf16 operands inside the kernel vs the f32 reference -> loose tolerance.
    max_err = float(jnp.max(jnp.abs(y - y_ref)))
    assert jnp.allclose(y, y_ref, atol=2e-2, rtol=2e-2), f"max_err={max_err}"

    print("KERNEL_OK")
</pallas_src>

<mosaic_0001>
module attributes {stable_mosaic.version = 11 : i64} {
  func.func @_mlp_kernel_resident(%arg0: i32, %arg1: memref<16x32xbf16, #tpu.memory_space<vmem>>, %arg2: memref<32x128xbf16, #tpu.memory_space<vmem>>, %arg3: memref<128x128xbf16, #tpu.memory_space<vmem>>, %arg4: memref<16x128xf32, #tpu.memory_space<vmem>>) attributes {dimension_semantics = [#tpu.dimension_semantics<parallel>], iteration_bounds = array<i64: 1>, scalar_prefetch = 0 : i64, scratch_operands = 0 : i64, tpu.core_type = #tpu.core_type<tc>, window_params = [{transform_indices = @transform_0, window_bounds = array<i64: 16, 32>}, {pipeline_mode = #tpu.pipeline_mode<synchronous>, transform_indices = @transform_1, window_bounds = array<i64: 32, 128>}, {pipeline_mode = #tpu.pipeline_mode<synchronous>, transform_indices = @transform_2, window_bounds = array<i64: 128, 128>}, {transform_indices = @transform_3, window_bounds = array<i64: 16, 128>}]} {
    %c0 = arith.constant 0 : index
    %c0_0 = arith.constant 0 : index
    %0 = vector.load %arg1[%c0, %c0_0] : memref<16x32xbf16, #tpu.memory_space<vmem>>, vector<16x32xbf16>
    %c0_1 = arith.constant 0 : index
    %c0_2 = arith.constant 0 : index
    %1 = vector.load %arg2[%c0_1, %c0_2] : memref<32x128xbf16, #tpu.memory_space<vmem>>, vector<32x128xbf16>
    %cst = arith.constant dense<0.000000e+00> : vector<16x128xf32>
    %2 = tpu.matmul %0, %1, %cst {dimension_numbers = #tpu.dot_dimension_numbers<[1], [0], [0], [1], [0, 0, 1, 1], [], []>} : vector<16x32xbf16>, vector<32x128xbf16>, vector<16x128xf32> -> vector<16x128xf32>
    %cst_3 = arith.constant 5.000000e-01 : f32
    %3 = vector.broadcast %cst_3 : f32 to vector<16x128xf32>
    %4 = arith.mulf %3, %2 : vector<16x128xf32>
    %cst_4 = arith.constant 0.707106769 : f32
    %5 = vector.broadcast %cst_4 : f32 to vector<16x128xf32>
    %6 = arith.mulf %2, %5 : vector<16x128xf32>
    %7 = math.absf %6 : vector<16x128xf32>
    %cst_5 = arith.constant 0.327591091 : f32
    %8 = vector.broadcast %cst_5 : f32 to vector<16x128xf32>
    %9 = arith.mulf %8, %7 : vector<16x128xf32>
    %cst_6 = arith.constant 1.000000e+00 : f32
    %10 = vector.broadcast %cst_6 : f32 to vector<16x128xf32>
    %11 = arith.addf %10, %9 : vector<16x128xf32>
    %cst_7 = arith.constant 1.000000e+00 : f32
    %12 = vector.broadcast %cst_7 : f32 to vector<16x128xf32>
    %13 = arith.divf %12, %11 : vector<16x128xf32>
    %cst_8 = arith.constant 1.06140542 : f32
    %14 = vector.broadcast %cst_8 : f32 to vector<16x128xf32>
    %15 = arith.mulf %14, %13 : vector<16x128xf32>
    %cst_9 = arith.constant -1.45315206 : f32
    %16 = vector.broadcast %cst_9 : f32 to vector<16x128xf32>
    %17 = arith.addf %15, %16 : vector<16x128xf32>
    %18 = arith.mulf %17, %13 : vector<16x128xf32>
    %cst_10 = arith.constant 1.42141378 : f32
    %19 = vector.broadcast %cst_10 : f32 to vector<16x128xf32>
    %20 = arith.addf %18, %19 : vector<16x128xf32>
    %21 = arith.mulf %20, %13 : vector<16x128xf32>
    %cst_11 = arith.constant -0.284496725 : f32
    %22 = vector.broadcast %cst_11 : f32 to vector<16x128xf32>
    %23 = arith.addf %21, %22 : vector<16x128xf32>
    %24 = arith.mulf %23, %13 : vector<16x128xf32>
    %cst_12 = arith.constant 0.254829586 : f32
    %25 = vector.broadcast %cst_12 : f32 to vector<16x128xf32>
    %26 = arith.addf %24, %25 : vector<16x128xf32>
    %27 = arith.mulf %26, %13 : vector<16x128xf32>
    %cst_13 = arith.constant 0.000000e+00 : f32
    %28 = vector.broadcast %cst_13 : f32 to vector<16x128xf32>
    %29 = arith.subf %28, %7 : vector<16x128xf32>
    %30 = arith.mulf %29, %7 : vector<16x128xf32>
    %31 = math.exp %30 : vector<16x128xf32>
    %32 = arith.mulf %27, %31 : vector<16x128xf32>
    %cst_14 = arith.constant 1.000000e+00 : f32
    %33 = vector.broadcast %cst_14 : f32 to vector<16x128xf32>
    %34 = arith.subf %33, %32 : vector<16x128xf32>
    %cst_15 = arith.constant 0.000000e+00 : f32
    %35 = vector.broadcast %cst_15 : f32 to vector<16x128xf32>
    %36 = arith.cmpf olt, %6, %35 : vector<16x128xf32>
    %cst_16 = arith.constant 0.000000e+00 : f32
    %37 = vector.broadcast %cst_16 : f32 to vector<16x128xf32>
    %38 = arith.subf %37, %34 : vector<16x128xf32>
    %39 = arith.select %36, %38, %34 : vector<16x128xi1>, vector<16x128xf32>
    %cst_17 = arith.constant 1.000000e+00 : f32
    %40 = vector.broadcast %cst_17 : f32 to vector<16x128xf32>
    %41 = arith.addf %40, %39 : vector<16x128xf32>
    %42 = arith.mulf %4, %41 : vector<16x128xf32>
    %43 = arith.truncf %42 : vector<16x128xf32> to vector<16x128xbf16>
    %c0_18 = arith.constant 0 : index
    %c0_19 = arith.constant 0 : index
    %44 = vector.load %arg3[%c0_18, %c0_19] : memref<128x128xbf16, #tpu.memory_space<vmem>>, vector<128x128xbf16>
    %cst_20 = arith.constant dense<0.000000e+00> : vector<16x128xf32>
    %45 = tpu.matmul %43, %44, %cst_20 {dimension_numbers = #tpu.dot_dimension_numbers<[1], [0], [0], [1], [0, 0, 1, 1], [], []>} : vector<16x128xbf16>, vector<128x128xbf16>, vector<16x128xf32> -> vector<16x128xf32>
    %c0_21 = arith.constant 0 : index
    %c0_22 = arith.constant 0 : index
    %46 = vector.load %arg4[%c0_21, %c0_22] : memref<16x128xf32, #tpu.memory_space<vmem>>, vector<16x128xf32>
    tpu.vector_store %arg4[%c0_21, %c0_22], %45 {strides = array<i32>} : memref<16x128xf32, #tpu.memory_space<vmem>>, vector<16x128xf32>,
    return
  }
  func.func @transform_0(%arg0: i32) -> (i32, i32) {
    %c0_i32 = arith.constant 0 : i32
    %c0_i32_0 = arith.constant 0 : i32
    return %arg0, %c0_i32 : i32, i32
  }
  func.func @transform_1(%arg0: i32) -> (i32, i32) {
    %c0_i32 = arith.constant 0 : i32
    %c0_i32_0 = arith.constant 0 : i32
    %c0_i32_1 = arith.constant 0 : i32
    return %c0_i32, %c0_i32_0 : i32, i32
  }
  func.func @transform_2(%arg0: i32) -> (i32, i32) {
    %c0_i32 = arith.constant 0 : i32
    %c0_i32_0 = arith.constant 0 : i32
    %c0_i32_1 = arith.constant 0 : i32
    return %c0_i32, %c0_i32_0 : i32, i32
  }
  func.func @transform_3(%arg0: i32) -> (i32, i32) {
    %c0_i32 = arith.constant 0 : i32
    %c0_i32_0 = arith.constant 0 : i32
    return %arg0, %c0_i32 : i32, i32
  }
}

</mosaic_0001>

<llo_original>
// kernel: tpu_custom_call.1
$region0: #{tpu_custom_call.1}
  #allocation0 [shape = 'u32[]', space=smem, size = 0x4, offset = 0x4, fixed_abs, tag = 'smem constant byte address 0x4 - core index']
  #allocation1 [shape = 'u32[144,128]{1,0:T(1,128)}', space=vmem, size = 0x12000, scoped, tag = 'internal scratch']
  %s0 = inlined_call_operand.hbm [shape: bf16[16,32], index: 0, kind: input, shape index: {}]
  %s1 = inlined_call_operand.hbm [shape: bf16[32,128], index: 1, kind: input, shape index: {}]
  %s2 = inlined_call_operand.hbm [shape: bf16[128,128], index: 2, kind: input, shape index: {}]
  %s3 = inlined_call_operand.hbm [shape: f32[16,128], index: 3, kind: output, shape index: {}]
  %s4 = sld [smem:[#allocation0]]
  $region34: #{tpu_custom_call.1} parent=0
    _
  %s6 = ssub.s32 1, %s4
  %s7 = scalar_select 0, %s6, %s4
  $region1: #{tpu_custom_call.1} parent=0
    #allocation2 [shape = 'u8[4096]{0}', space=vmem, size = 0x1000, scoped, tag = 'input window, operand 0, single buffered']
    #allocation3 [shape = 's32[1]{0}', space=sflag, size = 0x4, scoped, tag = 'scoped memory for tpu_custom_call.1']
    #allocation4 [shape = 's32[1]{0}', space=sflag, size = 0x4, scoped, tag = 'scoped memory for tpu_custom_call.1']
    #allocation5 [shape = 'u8[8192]{0}', space=vmem, size = 0x2000, scoped, tag = 'input window, operand 1, single buffered']
    #allocation6 [shape = 's32[1]{0}', space=sflag, size = 0x4, scoped, tag = 'scoped memory for tpu_custom_call.1']
    #allocation7 [shape = 'u8[32768]{0}', space=vmem, size = 0x8000, scoped, tag = 'input window, operand 2, single buffered']
    #allocation8 [shape = 'u8[8192]{0}', space=vmem, size = 0x2000, scoped, tag = 'output window, operand 0, single buffered']
    %8 = vsyncpa [#allocation3], 0
    %9 = vsyncpa [#allocation6], 0
    %10 = vsyncpa [#allocation4], 0
    // Predicated region
    $region2: #{tpu_custom_call.1} parent=1 // pred_check
      _
    $region3: #{tpu_custom_call.1} parent=1 // pred_check_branch
      %12 = sbr.rel (0) target = $region5
    $region4: #{tpu_custom_call.1} parent=1 // pred_region
      %s14 = ssub.s32 128, 128
      %15 = vsyncadd [#allocation3], %s14
      %s16 = sshll.u32 [#allocation2], 4
      %s17 = int_to_ptr.vmem [resolvable:$true] %s16
      %22 = dma.hbm_to_vmem [thread:$0]  %s0, 128, %s17, [#allocation3], 64, 64, 4
    $region5: #{tpu_custom_call.1} parent=1 // pred_fallthru
      _
    // Predicated region
    $region6: #{tpu_custom_call.1} parent=1 // pred_check
      _
    $region7: #{tpu_custom_call.1} parent=1 // pred_check_branch
      %24 = sbr.rel (0) target = $region9
    $region8: #{tpu_custom_call.1} parent=1 // pred_region
      %s26 = ssub.s32 256, 256
      %27 = vsyncadd [#allocation6], %s26
      %s28 = sshll.u32 [#allocation5], 4
      %s29 = int_to_ptr.vmem [resolvable:$true] %s28
      %34 = dma.hbm_to_vmem [thread:$0]  %s1, 256, %s29, [#allocation6], 64, 64, 4
    $region9: #{tpu_custom_call.1} parent=1 // pred_fallthru
      _
    // Predicated region
    $region10: #{tpu_custom_call.1} parent=1 // pred_check
      _
    $region11: #{tpu_custom_call.1} parent=1 // pred_check_branch
      %36 = sbr.rel (0) target = $region13
    $region12: #{tpu_custom_call.1} parent=1 // pred_region
      %s38 = ssub.s32 1024, 1024
      %39 = vsyncadd [#allocation6], %s38
      %s40 = sshll.u32 [#allocation7], 4
      %s41 = int_to_ptr.vmem [resolvable:$true] %s40
      %46 = dma.hbm_to_vmem [thread:$0]  %s2, 1024, %s41, [#allocation6], 64, 64, 4
    $region13: #{tpu_custom_call.1} parent=1 // pred_fallthru
      _
    // Predicated region
    $region14: #{tpu_custom_call.1} parent=1 // pred_check
      _
    $region15: #{tpu_custom_call.1} parent=1 // pred_check_branch
      %48 = sbr.rel (0) target = $region17
    $region16: #{tpu_custom_call.1} parent=1 // pred_region
      %49 = dma.done [#allocation3], 128
    $region17: #{tpu_custom_call.1} parent=1 // pred_fallthru
      _
    // Predicated region
    $region18: #{tpu_custom_call.1} parent=1 // pred_check
      _
    $region19: #{tpu_custom_call.1} parent=1 // pred_check_branch
      %51 = sbr.rel (0) target = $region21
    $region20: #{tpu_custom_call.1} parent=1 // pred_region
      %52 = dma.done [#allocation6], 256
    $region21: #{tpu_custom_call.1} parent=1 // pred_fallthru
      _
    // Predicated region
    $region22: #{tpu_custom_call.1} parent=1 // pred_check
      _
    $region23: #{tpu_custom_call.1} parent=1 // pred_check_branch
      %54 = sbr.rel (0) target = $region25
    $region24: #{tpu_custom_call.1} parent=1 // pred_region
      %55 = dma.done [#allocation6], 1024
    $region25: #{tpu_custom_call.1} parent=1 // pred_fallthru
      _
    %v57 = vld [vmem:[#allocation2] sm:$0xf]
    %v58 = vld [vmem:[#allocation2 + $0x4] sm:$0xf]
    %v59 = vld [vmem:[#allocation5] sm:$0xf]
    %v60 = vld [vmem:[#allocation5 + $0x4] sm:$0xf]
    %v61 = vld [vmem:[#allocation5 + $0x8] sm:$0xf]
    %v62 = vld [vmem:[#allocation5 + $0xc] sm:$0xf]
    %v65 = vunpack.c.l.b16 %v57
    %v66 = vunpack.c.l.b16 %v58
    %v67 = vpack.c.b16 %v66, %v65
    %v72 = vunpack.c.l.b16 %v59
    %v73 = vunpack.c.l.b16 %v60
    %v74 = vunpack.c.l.b16 %v61
    %v75 = vunpack.c.l.b16 %v62
    %v76 = vpack.c.b16 %v73, %v72
    %v77 = vpack.c.b16 %v75, %v74
    %vm80 = vcmask 261120
    %v82 = vsel %vm80, %v67, 0
    %84 = vmatprep.subr.bf16.mxu0 0
    %85 = vmatpush1.bf16.msra.mxu0 %v76
    %86 = vmatprep.subr.bf16.mxu0 0
    %87 = vmatpush1.bf16.msra.mxu0 %v77
    %88 = vmatprep.subr.bf16.mxu0 0
    %89 = vmatpush1.bf16.msra.mxu0 0
    %90 = vmatprep.subr.bf16.mxu0 0
    %91 = vmatpush1.bf16.msra.mxu0 0
    %92 = vmatprep.subr.bf16.mxu0 0
    %93 = vmatpush1.bf16.msra.mxu0 0
    %94 = vmatprep.subr.bf16.mxu0 0
    %95 = vmatpush1.bf16.msra.mxu0 0
    %96 = vmatprep.subr.bf16.mxu0 0
    %97 = vmatpush1.bf16.msra.mxu0 0
    %98 = vmatprep.subr.bf16.mxu0 0
    %99 = vmatpush1.bf16.msra.mxu0 0
    %100 = vmatprep.subr.bf16.mxu0 0
    %101 = vmatpush1.bf16.msra.mxu0 0
    %102 = vmatprep.subr.bf16.mxu0 0
    %103 = vmatpush1.bf16.msra.mxu0 0
    %104 = vmatprep.subr.bf16.mxu0 0
    %105 = vmatpush1.bf16.msra.mxu0 0
    %106 = vmatprep.subr.bf16.mxu0 0
    %107 = vmatpush1.bf16.msra.mxu0 0
    %108 = vmatprep.subr.bf16.mxu0 0
    %109 = vmatpush1.bf16.msra.mxu0 0
    %110 = vmatprep.subr.bf16.mxu0 0
    %111 = vmatpush1.bf16.msra.mxu0 0
    %112 = vmatprep.subr.bf16.mxu0 0
    %113 = vmatpush1.bf16.msra.mxu0 0
    %114 = vmatprep.subr.bf16.mxu0 0
    %115 = vmatpush1.bf16.msra.mxu0 0
    %116 = vmatprep.mubr.bf16.mxu0 0
    %117 = vmatmul.mubr.bf16.gmra.mrb[0].mxu0 %v82
    %v118 = vpop.f32.mrb[0].mxu0
    %v119 = vadd.f32 0.0, %v118
    %v120 = vpop.f32.mrb[0].mxu0
    %v121 = vpop.f32.mrb[0].mxu0
    %v122 = vadd.f32 0.0, %v121
    %v123 = vpop.f32.mrb[0].mxu0
    %124 = vdwg.mxu0
    %v125 = vmul.f32 %v119, 0.5
    %v126 = vmul.f32 %v122, 0.5
    %v127 = vmul.f32 %v119, 0.70710677
    %v128 = vmul.f32 %v122, 0.70710677
    %v129 = vand.u32 2147483647, %v127
    %v130 = vand.u32 2147483647, %v128
    %v131 = vmul.f32 %v129, 0.3275911
    %v132 = vmul.f32 %v130, 0.3275911
    %v133 = vadd.f32 %v131, 1.0
    %v134 = vadd.f32 %v132, 1.0
    %v135 = vrcp.pop %v133
    %v136 = vmul.f32 1.0, %v135
    %v137 = vrcp.pop %v134
    %v138 = vmul.f32 1.0, %v137
    %v139 = vmul.f32 %v136, 1.0614054
    %v140 = vmul.f32 %v138, 1.0614054
    %v141 = vadd.f32 %v139, -1.4531521
    %v142 = vadd.f32 %v140, -1.4531521
    %v143 = vmul.f32 %v141, %v136
    %v144 = vmul.f32 %v142, %v138
    %v145 = vadd.f32 %v143, 1.4214138
    %v146 = vadd.f32 %v144, 1.4214138
    %v147 = vmul.f32 %v145, %v136
    %v148 = vmul.f32 %v146, %v138
    %v149 = vadd.f32 %v147, -0.28449672
    %v150 = vadd.f32 %v148, -0.28449672
    %v151 = vmul.f32 %v149, %v136
    %v152 = vmul.f32 %v150, %v138
    %v153 = vadd.f32 %v151, 0.2548296
    %v154 = vadd.f32 %v152, 0.2548296
    %v155 = vmul.f32 %v153, %v136
    %v156 = vmul.f32 %v154, %v138
    %v157 = vsub.f32 0.0, %v129
    %v158 = vsub.f32 0.0, %v130
    %v159 = vmul.f32 %v157, %v129
    %v160 = vmul.f32 %v158, %v130
    %v161 = vmul.f32 %v159, 1.442695
    %v162 = vpow.pop %v161
    %v163 = vmul.f32 %v160, 1.442695
    %v164 = vpow.pop %v163
    %v165 = vmul.f32 %v155, %v162
    %v166 = vmul.f32 %v156, %v164
    %v167 = vsub.f32 1.0, %v165
    %v168 = vsub.f32 1.0, %v166
    %vm169 = vcmp.lt.f32.partialorder %v127, 0.0
    %vm170 = vcmp.lt.f32.partialorder %v128, 0.0
    %v171 = vsub.f32 0.0, %v167
    %v172 = vsub.f32 0.0, %v168
    %v173 = vsel %vm169, %v171, %v167
    %v174 = vsel %vm170, %v172, %v168
    %v175 = vadd.f32 %v173, 1.0
    %v176 = vadd.f32 %v174, 1.0
    %v177 = vmul.f32 %v125, %v175
    %v178 = vmul.f32 %v126, %v176
    %v179 = vpack.c.bf16 %v178, %v177
    %v180 = vld [vmem:[#allocation7] sm:$0xf]
    %v181 = vld [vmem:[#allocation7 + $0x4] sm:$0xf]
    %v182 = vld [vmem:[#allocation7 + $0x8] sm:$0xf]
    %v183 = vld [vmem:[#allocation7 + $0xc] sm:$0xf]
    %v184 = vld [vmem:[#allocation7 + $0x10] sm:$0xf]
    %v185 = vld [vmem:[#allocation7 + $0x14] sm:$0xf]
    %v186 = vld [vmem:[#allocation7 + $0x18] sm:$0xf]
    %v187 = vld [vmem:[#allocation7 + $0x1c] sm:$0xf]
    %v188 = vld [vmem:[#allocation7 + $0x20] sm:$0xf]
    %v189 = vld [vmem:[#allocation7 + $0x24] sm:$0xf]
    %v190 = vld [vmem:[#allocation7 + $0x28] sm:$0xf]
    %v191 = vld [vmem:[#allocation7 + $0x2c] sm:$0xf]
    %v192 = vld [vmem:[#allocation7 + $0x30] sm:$0xf]
    %v193 = vld [vmem:[#allocation7 + $0x34] sm:$0xf]
    %v194 = vld [vmem:[#allocation7 + $0x38] sm:$0xf]
    %v195 = vld [vmem:[#allocation7 + $0x3c] sm:$0xf]
    %v212 = vunpack.c.l.b16 %v180
    %v213 = vunpack.c.l.b16 %v181
    %v214 = vunpack.c.l.b16 %v182
    %v215 = vunpack.c.l.b16 %v183
    %v216 = vunpack.c.l.b16 %v184
    %v217 = vunpack.c.l.b16 %v185
    %v218 = vunpack.c.l.b16 %v186
    %v219 = vunpack.c.l.b16 %v187
    %v220 = vunpack.c.l.b16 %v188
    %v221 = vunpack.c.l.b16 %v189
    %v222 = vunpack.c.l.b16 %v190
    %v223 = vunpack.c.l.b16 %v191
    %v224 = vunpack.c.l.b16 %v192
    %v225 = vunpack.c.l.b16 %v193
    %v226 = vunpack.c.l.b16 %v194
    %v227 = vunpack.c.l.b16 %v195
    %v228 = vpack.c.b16 %v213, %v212
    %v229 = vpack.c.b16 %v215, %v214
    %v230 = vpack.c.b16 %v217, %v216
    %v231 = vpack.c.b16 %v219, %v218
    %v232 = vpack.c.b16 %v221, %v220
    %v233 = vpack.c.b16 %v223, %v222
    %v234 = vpack.c.b16 %v225, %v224
    %v235 = vpack.c.b16 %v227, %v226
    %244 = vmatprep.subr.bf16.mxu0 0
    %245 = vmatpush1.bf16.msra.mxu0 %v228
    %246 = vmatprep.subr.bf16.mxu0 0
    %247 = vmatpush1.bf16.msra.mxu0 %v229
    %248 = vmatprep.subr.bf16.mxu0 0
    %249 = vmatpush1.bf16.msra.mxu0 %v230
    %250 = vmatprep.subr.bf16.mxu0 0
    %251 = vmatpush1.bf16.msra.mxu0 %v231
    %252 = vmatprep.subr.bf16.mxu0 0
    %253 = vmatpush1.bf16.msra.mxu0 %v232
    %254 = vmatprep.subr.bf16.mxu0 0
    %255 = vmatpush1.bf16.msra.mxu0 %v233
    %256 = vmatprep.subr.bf16.mxu0 0
    %257 = vmatpush1.bf16.msra.mxu0 %v234
    %258 = vmatprep.subr.bf16.mxu0 0
    %259 = vmatpush1.bf16.msra.mxu0 %v235
    %260 = vmatprep.subr.bf16.mxu0 0
    %261 = vmatpush1.bf16.msra.mxu0 0
    %262 = vmatprep.subr.bf16.mxu0 0
    %263 = vmatpush1.bf16.msra.mxu0 0
    %264 = vmatprep.subr.bf16.mxu0 0
    %265 = vmatpush1.bf16.msra.mxu0 0
    %266 = vmatprep.subr.bf16.mxu0 0
    %267 = vmatpush1.bf16.msra.mxu0 0
    %268 = vmatprep.subr.bf16.mxu0 0
    %269 = vmatpush1.bf16.msra.mxu0 0
    %270 = vmatprep.subr.bf16.mxu0 0
    %271 = vmatpush1.bf16.msra.mxu0 0
    %272 = vmatprep.subr.bf16.mxu0 0
    %273 = vmatpush1.bf16.msra.mxu0 0
    %274 = vmatprep.subr.bf16.mxu0 0
    %275 = vmatpush1.bf16.msra.mxu0 0
    %276 = vmatprep.mubr.bf16.mxu0 0
    %277 = vmatmul.mubr.bf16.gmra.mrb[0].mxu0 %v179
    %v278 = vpop.f32.mrb[0].mxu0
    %v279 = vadd.f32 0.0, %v278
    %v280 = vpop.f32.mrb[0].mxu0
    %v281 = vpop.f32.mrb[0].mxu0
    %v282 = vadd.f32 0.0, %v281
    %v283 = vpop.f32.mrb[0].mxu0
    %284 = vdwg.mxu0
    %285 = vst [vmem:[#allocation8] sm:$0xff] %v279
    %286 = vst [vmem:[#allocation8 + $0x8] sm:$0xff] %v282
    // Predicated region
    $region26: #{tpu_custom_call.1} parent=1 // pred_check
      _
    $region27: #{tpu_custom_call.1} parent=1 // pred_check_branch
      %288 = sbr.rel (0) target = $region29
    $region28: #{tpu_custom_call.1} parent=1 // pred_region
      %s290 = ssub.s32 256, 256
      %291 = vsyncadd [#allocation4], %s290
      %s292 = sshll.u32 [#allocation8], 4
      %s293 = int_to_ptr.vmem [resolvable:$true] %s292
      %298 = dma.vmem_to_hbm [thread:$0]  %s293, 256, %s3, [#allocation4], 128, 128, 8
    $region29: #{tpu_custom_call.1} parent=1 // pred_fallthru
      _
    // Predicated region
    $region30: #{tpu_custom_call.1} parent=1 // pred_check
      _
    $region31: #{tpu_custom_call.1} parent=1 // pred_check_branch
      %300 = sbr.rel (0) target = $region33
    $region32: #{tpu_custom_call.1} parent=1 // pred_region
      %301 = dma.done [#allocation4], 256
    $region33: #{tpu_custom_call.1} parent=1 // pred_fallthru
      _
    %302 = vsyncpa [#allocation3], 1
    %303 = vsyncpa [#allocation6], 1
    %304 = vsyncpa [#allocation4], 1

</llo_original>
